<compile_context>
chip_gen: v6e
topology: v6e:2x2x1
jax: 0.10.0
libtpu: 0.0.40
codegen_flags: <defaults>
</compile_context>

<pallas_src>
import jax
import jax.numpy as jnp
from jax.experimental import pallas as pl
from jax.experimental.pallas import tpu as pltpu

NUM_ENVS = 2          # number of task-specific heads (value heads)
HIDDEN = 128
IN_DIM = 4
OUT_LANES = 128       # lane-dense packed output width (cols 0..4 meaningful)
B = 8                 # batch size for the example run

# columns of the packed head output
COL_MU, COL_SIGMA, COL_VALUE, COL_MU_D, COL_SIGMA_D = 0, 1, 2, 3, 4


# ---------------------------------------------------------------------------
# Pallas kernel: one fused hidden matmul + relu, one fused block-diagonal head
# matmul, masked softplus, single lane-dense output store.
# ---------------------------------------------------------------------------
def policy_fwd_kernel(env_ref, y_ref, wh_ref, bh_ref, whd_ref, bhd_ref, out_ref):
    del env_ref  # only used by the index_maps (head selection)

    y = y_ref[...]                                                    # [TB, 4]

    # h = relu(y @ [w1 | w_pi0] + [b1 | b_pi0])  -> [TB, 256]
    # (columns 0:128 == x, columns 128:256 == z)
    h = jnp.maximum(
        jnp.dot(y, wh_ref[...], preferred_element_type=jnp.float32) + bh_ref[...],
        0.0)

    # Block-diagonal fused heads: one K=256 matmul producing a [TB, 128] slab
    # whose columns are [mu, sigma2, value, mu_dist, sigma2_dist, 0, ...].
    heads = jnp.dot(h, whd_ref[0], preferred_element_type=jnp.float32) + bhd_ref[0]

    # softplus (== log(1 + e^v), stable) only on the sigma columns; the select
    # is a cheap VPU mask, the transcendental runs on the otherwise-idle EUP.
    col = jax.lax.broadcasted_iota(jnp.int32, heads.shape, 1)
    is_sigma = (col == COL_SIGMA) | (col == COL_SIGMA_D)
    out_ref[...] = jnp.where(is_sigma, jnp.logaddexp(heads, 0.0), heads)


# ---------------------------------------------------------------------------
# One-time parameter packing (per parameter update, NOT per forward call).
# ---------------------------------------------------------------------------
def pack_params(params, num_envs=NUM_ENVS):
    w1, b1 = params["affine1"]           # [4,128], [1,128]
    wp, bp = params["affine_pi0"]        # [4,128], [1,128]
    w_mu, b_mu = params["mu_heads"]      # [num_envs+1,128,1], [num_envs+1,1]
    w_sg, b_sg = params["sigma2_heads"]  # [num_envs+1,128,1], [num_envs+1,1]
    w_va, b_va = params["value_heads"]   # [num_envs,128,1],   [num_envs,1]

    # Fused hidden layer.
    w_hidden = jnp.concatenate([w1, wp], axis=1)      # [4, 256]
    b_hidden = jnp.concatenate([b1, bp], axis=1)      # [1, 256]

    ne = num_envs
    # Top block (rows 0:128, consumes x): cols [mu_e, sigma2_e, value_e].
    top = jnp.concatenate([w_mu[:ne], w_sg[:ne], w_va], axis=2)              # [ne,128,3]
    # Bottom block (rows 128:256, consumes z): cols [mu_shared, sigma2_shared].
    bot = jnp.broadcast_to(
        jnp.concatenate([w_mu[ne], w_sg[ne]], axis=1)[None],
        (ne, HIDDEN, 2))                                                     # [ne,128,2]
    blk = jnp.concatenate(
        [jnp.concatenate([top, jnp.zeros((ne, HIDDEN, 2), jnp.float32)], axis=2),
         jnp.concatenate([jnp.zeros((ne, HIDDEN, 3), jnp.float32), bot], axis=2)],
        axis=1)                                                              # [ne,256,5]
    w_heads = jnp.pad(blk, ((0, 0), (0, 0), (0, OUT_LANES - 5)))             # [ne,256,128]

    b5 = jnp.stack(
        [b_mu[:ne, 0], b_sg[:ne, 0], b_va[:, 0],
         jnp.broadcast_to(b_mu[ne, 0], (ne,)),
         jnp.broadcast_to(b_sg[ne, 0], (ne,))], axis=1)                      # [ne,5]
    b_heads = jnp.pad(b5, ((0, 0), (0, OUT_LANES - 5)))[:, None, :]          # [ne,1,128]

    return dict(w_hidden=w_hidden, b_hidden=b_hidden,
                w_heads=w_heads, b_heads=b_heads)


# ---------------------------------------------------------------------------
# Forward wrapper: single pallas_call, env_idx is a runtime int32 (no retrace).
# ---------------------------------------------------------------------------
def policy_forward(y, packed, env_idx):
    """Policy.forward(y, env_idx) -> (mu, sigma, value, mu_dist, sigma_dist)."""
    bsz = y.shape[0]
    tb = bsz if bsz <= 512 else 512          # batch tile (whole batch at toy sizes)
    assert bsz % tb == 0

    env = jnp.asarray(env_idx, jnp.int32).reshape((1,))

    out = pl.pallas_call(
        policy_fwd_kernel,
        out_shape=jax.ShapeDtypeStruct((bsz, OUT_LANES), jnp.float32),
        grid_spec=pltpu.PrefetchScalarGridSpec(
            num_scalar_prefetch=1,
            grid=(bsz // tb,),
            in_specs=[
                pl.BlockSpec((tb, IN_DIM), lambda i, env: (i, 0)),
                pl.BlockSpec((IN_DIM, 2 * HIDDEN), lambda i, env: (0, 0)),
                pl.BlockSpec((1, 2 * HIDDEN), lambda i, env: (0, 0)),
                pl.BlockSpec((1, 2 * HIDDEN, OUT_LANES),
                             lambda i, env: (env[0], 0, 0)),
                pl.BlockSpec((1, 1, OUT_LANES),
                             lambda i, env: (env[0], 0, 0)),
            ],
            out_specs=pl.BlockSpec((tb, OUT_LANES), lambda i, env: (i, 0)),
        ),
        compiler_params=pltpu.CompilerParams(
            dimension_semantics=("parallel",)),   # batch blocks shard across v7x TCs
    )(env, y, packed["w_hidden"], packed["b_hidden"],
      packed["w_heads"], packed["b_heads"])

    mu      = out[:, COL_MU:COL_MU + 1]
    sigma   = out[:, COL_SIGMA:COL_SIGMA + 1]
    value   = out[:, COL_VALUE:COL_VALUE + 1]
    mu_d    = out[:, COL_MU_D:COL_MU_D + 1]
    sigma_d = out[:, COL_SIGMA_D:COL_SIGMA_D + 1]
    return mu, sigma, value, mu_d, sigma_d


# ---------------------------------------------------------------------------
# Deterministic parameter initialization (synthetic; mirrors the shapes of
# Policy.__init__, including normalized-column init on mu / value heads).
# ---------------------------------------------------------------------------
def normalized_columns_init(key, shape, std):
    w = jax.random.normal(key, shape, dtype=jnp.float32)
    w = w * std / jnp.sqrt(jnp.sum(w * w, axis=0, keepdims=True))
    return w


def init_params(key):
    ks = jax.random.split(key, 8)
    params = {}
    params["affine1"] = (
        0.1 * jax.random.normal(ks[0], (IN_DIM, HIDDEN), jnp.float32),
        jnp.zeros((1, HIDDEN), jnp.float32),
    )
    params["affine_pi0"] = (
        0.1 * jax.random.normal(ks[1], (IN_DIM, HIDDEN), jnp.float32),
        jnp.zeros((1, HIDDEN), jnp.float32),
    )
    params["mu_heads"] = (
        normalized_columns_init(ks[2], (NUM_ENVS + 1, HIDDEN, 1), 0.01),
        jnp.zeros((NUM_ENVS + 1, 1), jnp.float32),
    )
    params["sigma2_heads"] = (
        0.1 * jax.random.normal(ks[3], (NUM_ENVS + 1, HIDDEN, 1), jnp.float32),
        jnp.zeros((NUM_ENVS + 1, 1), jnp.float32),
    )
    params["value_heads"] = (
        normalized_columns_init(ks[4], (NUM_ENVS, HIDDEN, 1), 1.0),
        jnp.zeros((NUM_ENVS, 1), jnp.float32),
    )
    return params


# Pure-JAX reference of the PyTorch forward, for a correctness check.
def policy_forward_ref(y, params, env_idx):
    w1, b1 = params["affine1"]
    wp, bp = params["affine_pi0"]
    w_mu, b_mu = params["mu_heads"]
    w_sg, b_sg = params["sigma2_heads"]
    w_va, b_va = params["value_heads"]
    softplus = lambda v: jnp.logaddexp(v, 0.0)
    x = jax.nn.relu(y @ w1 + b1)
    z = jax.nn.relu(y @ wp + bp)
    mu = x @ w_mu[env_idx] + b_mu[env_idx]
    sigma = softplus(x @ w_sg[env_idx] + b_sg[env_idx])
    value = x @ w_va[env_idx] + b_va[env_idx]
    mu_d = z @ w_mu[NUM_ENVS] + b_mu[NUM_ENVS]
    sigma_d = softplus(z @ w_sg[NUM_ENVS] + b_sg[NUM_ENVS])
    return mu, sigma, value, mu_d, sigma_d


if __name__ == "__main__":
    key = jax.random.PRNGKey(0)
    k_param, k_in = jax.random.split(key)
    params = init_params(k_param)
    packed = pack_params(params)      # once per parameter update, not per call
    y = jax.random.normal(k_in, (B, IN_DIM), jnp.float32)   # observation batch

    fwd = jax.jit(policy_forward)     # env_idx is traced -> single compilation

    for env_idx in range(NUM_ENVS):
        outs = jax.block_until_ready(fwd(y, packed, jnp.int32(env_idx)))
        refs = policy_forward_ref(y, params, env_idx)
        for o, r in zip(outs, refs):
            assert o.shape == (B, 1) and o.dtype == jnp.float32
            assert jnp.allclose(o, r, atol=1e-4, rtol=1e-4)

    print("KERNEL_OK")
</pallas_src>

<mosaic_0001>
module attributes {stable_mosaic.version = 11 : i64} {
  func.func @policy_fwd_kernel(%arg0: i32, %arg1: memref<1xi32, #tpu.memory_space<smem>>, %arg2: memref<8x4xf32, #tpu.memory_space<vmem>>, %arg3: memref<4x256xf32, #tpu.memory_space<vmem>>, %arg4: memref<1x256xf32, #tpu.memory_space<vmem>>, %arg5: memref<1x256x128xf32, #tpu.memory_space<vmem>>, %arg6: memref<1x1x128xf32, #tpu.memory_space<vmem>>, %arg7: memref<8x128xf32, #tpu.memory_space<vmem>>) attributes {dimension_semantics = [#tpu.dimension_semantics<parallel>], iteration_bounds = array<i64: 1>, scalar_prefetch = 1 : i64, scratch_operands = 0 : i64, tpu.core_type = #tpu.core_type<tc>, window_params = [{transform_indices = @transform_0, window_bounds = array<i64: 8, 4>}, {pipeline_mode = #tpu.pipeline_mode<synchronous>, transform_indices = @transform_1, window_bounds = array<i64: 4, 256>}, {pipeline_mode = #tpu.pipeline_mode<synchronous>, transform_indices = @transform_2, window_bounds = array<i64: 1, 256>}, {transform_indices = @transform_3, window_bounds = array<i64: 1, 256, 128>}, {transform_indices = @transform_4, window_bounds = array<i64: 1, 1, 128>}, {transform_indices = @transform_5, window_bounds = array<i64: 8, 128>}]} {
    %c0 = arith.constant 0 : index
    %c0_0 = arith.constant 0 : index
    %0 = vector.load %arg2[%c0, %c0_0] : memref<8x4xf32, #tpu.memory_space<vmem>>, vector<8x4xf32>
    %c0_1 = arith.constant 0 : index
    %c0_2 = arith.constant 0 : index
    %1 = vector.load %arg3[%c0_1, %c0_2] : memref<4x256xf32, #tpu.memory_space<vmem>>, vector<4x256xf32>
    %cst = arith.constant dense<0.000000e+00> : vector<8x256xf32>
    %2 = tpu.matmul %0, %1, %cst {dimension_numbers = #tpu.dot_dimension_numbers<[1], [0], [0], [1], [0, 0, 1, 1], [], []>} : vector<8x4xf32>, vector<4x256xf32>, vector<8x256xf32> -> vector<8x256xf32>
    %c0_3 = arith.constant 0 : index
    %c0_4 = arith.constant 0 : index
    %3 = vector.load %arg4[%c0_3, %c0_4] : memref<1x256xf32, #tpu.memory_space<vmem>>, vector<1x256xf32>
    %4 = vector.broadcast %3 : vector<1x256xf32> to vector<8x256xf32>
    %5 = arith.addf %2, %4 : vector<8x256xf32>
    %cst_5 = arith.constant 0.000000e+00 : f32
    %6 = vector.broadcast %cst_5 : f32 to vector<8x256xf32>
    %7 = arith.maximumf %5, %6 : vector<8x256xf32>
    %c0_6 = arith.constant 0 : index
    %c0_7 = arith.constant 0 : index
    %c0_8 = arith.constant 0 : index
    %8 = vector.load %arg5[%c0_6, %c0_7, %c0_8] : memref<1x256x128xf32, #tpu.memory_space<vmem>>, vector<1x256x128xf32>
    %9 = vector.shape_cast %8 : vector<1x256x128xf32> to vector<256x128xf32>
    %cst_9 = arith.constant dense<0.000000e+00> : vector<8x128xf32>
    %10 = tpu.matmul %7, %9, %cst_9 {dimension_numbers = #tpu.dot_dimension_numbers<[1], [0], [0], [1], [0, 0, 1, 1], [], []>} : vector<8x256xf32>, vector<256x128xf32>, vector<8x128xf32> -> vector<8x128xf32>
    %c0_10 = arith.constant 0 : index
    %c0_11 = arith.constant 0 : index
    %c0_12 = arith.constant 0 : index
    %11 = vector.load %arg6[%c0_10, %c0_11, %c0_12] : memref<1x1x128xf32, #tpu.memory_space<vmem>>, vector<1x1x128xf32>
    %12 = vector.shape_cast %11 : vector<1x1x128xf32> to vector<1x128xf32>
    %13 = vector.broadcast %12 : vector<1x128xf32> to vector<8x128xf32>
    %14 = arith.addf %10, %13 : vector<8x128xf32>
    %15 = tpu.iota {dimensions = array<i32: 1>} : vector<8x128xi32>
    %c1_i32 = arith.constant 1 : i32
    %16 = vector.broadcast %c1_i32 : i32 to vector<8x128xi32>
    %17 = arith.cmpi eq, %15, %16 : vector<8x128xi32>
    %c4_i32 = arith.constant 4 : i32
    %18 = vector.broadcast %c4_i32 : i32 to vector<8x128xi32>
    %19 = arith.cmpi eq, %15, %18 : vector<8x128xi32>
    %20 = arith.ori %17, %19 : vector<8x128xi1>
    %cst_13 = arith.constant 0.000000e+00 : f32
    %21 = vector.broadcast %cst_13 : f32 to vector<8x128xf32>
    %22 = arith.maximumf %14, %21 : vector<8x128xf32>
    %23 = vector.broadcast %cst_13 : f32 to vector<8x128xf32>
    %24 = arith.subf %14, %23 : vector<8x128xf32>
    %25 = arith.cmpf one, %24, %24 : vector<8x128xf32>
    %26 = vector.broadcast %cst_13 : f32 to vector<8x128xf32>
    %27 = arith.addf %14, %26 : vector<8x128xf32>
    %28 = math.absf %24 : vector<8x128xf32>
    %cst_14 = arith.constant 0.000000e+00 : f32
    %29 = vector.broadcast %cst_14 : f32 to vector<8x128xf32>
    %30 = arith.subf %29, %28 : vector<8x128xf32>
    %31 = math.exp %30 : vector<8x128xf32>
    %32 = math.log1p %31 : vector<8x128xf32>
    %33 = arith.addf %22, %32 : vector<8x128xf32>
    %34 = arith.select %25, %27, %33 : vector<8x128xi1>, vector<8x128xf32>
    %35 = arith.select %20, %34, %14 : vector<8x128xi1>, vector<8x128xf32>
    %c0_15 = arith.constant 0 : index
    %c0_16 = arith.constant 0 : index
    %36 = vector.load %arg7[%c0_15, %c0_16] : memref<8x128xf32, #tpu.memory_space<vmem>>, vector<8x128xf32>
    tpu.vector_store %arg7[%c0_15, %c0_16], %35 {strides = array<i32>} : memref<8x128xf32, #tpu.memory_space<vmem>>, vector<8x128xf32>,
    return
  }
  func.func @transform_0(%arg0: i32, %arg1: memref<1xi32, #tpu.memory_space<smem>>) -> (i32, i32) {
    %c0_i32 = arith.constant 0 : i32
    %c0_i32_0 = arith.constant 0 : i32
    return %arg0, %c0_i32 : i32, i32
  }
  func.func @transform_1(%arg0: i32, %arg1: memref<1xi32, #tpu.memory_space<smem>>) -> (i32, i32) {
    %c0_i32 = arith.constant 0 : i32
    %c0_i32_0 = arith.constant 0 : i32
    %c0_i32_1 = arith.constant 0 : i32
    return %c0_i32, %c0_i32_0 : i32, i32
  }
  func.func @transform_2(%arg0: i32, %arg1: memref<1xi32, #tpu.memory_space<smem>>) -> (i32, i32) {
    %c0_i32 = arith.constant 0 : i32
    %c0_i32_0 = arith.constant 0 : i32
    %c0_i32_1 = arith.constant 0 : i32
    return %c0_i32, %c0_i32_0 : i32, i32
  }
  func.func @transform_3(%arg0: i32, %arg1: memref<1xi32, #tpu.memory_space<smem>>) -> (i32, i32, i32) {
    %c0 = arith.constant 0 : index
    %0 = memref.load %arg1[%c0] : memref<1xi32, #tpu.memory_space<smem>>
    %c0_i32 = arith.constant 0 : i32
    %c0_i32_0 = arith.constant 0 : i32
    %c0_i32_1 = arith.constant 0 : i32
    return %0, %c0_i32, %c0_i32_0 : i32, i32, i32
  }
  func.func @transform_4(%arg0: i32, %arg1: memref<1xi32, #tpu.memory_space<smem>>) -> (i32, i32, i32) {
    %c0 = arith.constant 0 : index
    %0 = memref.load %arg1[%c0] : memref<1xi32, #tpu.memory_space<smem>>
    %c0_i32 = arith.constant 0 : i32
    %c0_i32_0 = arith.constant 0 : i32
    %c0_i32_1 = arith.constant 0 : i32
    return %0, %c0_i32, %c0_i32_0 : i32, i32, i32
  }
  func.func @transform_5(%arg0: i32, %arg1: memref<1xi32, #tpu.memory_space<smem>>) -> (i32, i32) {
    %c0_i32 = arith.constant 0 : i32
    %c0_i32_0 = arith.constant 0 : i32
    return %arg0, %c0_i32 : i32, i32
  }
}

</mosaic_0001>

<llo_original>
// kernel: policy_forward.1
$region0: #{policy_forward.1}
  #allocation0 [shape = 'u32[]', space=smem, size = 0x4, offset = 0x4, fixed_abs, tag = 'smem constant byte address 0x4 - core index']
  #allocation1 [shape = 'u32[144,128]{1,0:T(1,128)}', space=vmem, size = 0x12000, scoped, tag = 'internal scratch']
  #allocation2 [shape = 's32[1]{0}', space=sflag, size = 0x4, scoped, tag = 'scoped memory for policy_forward.1']
  #allocation3 [shape = 's32[1]{0:T(128)S(6)}', space=smem, size = 0x200, scoped, tag = 'prefetched SMEM operand 0']
  %s0 = inlined_call_operand.<no memory space> [shape: s32[1], index: 0, kind: input, shape index: {}]
  %s1 = inlined_call_operand.vmem [shape: f32[8,4], index: 1, kind: input, shape index: {}]
  %s2 = inlined_call_operand.vmem [shape: f32[4,256], index: 2, kind: input, shape index: {}]
  %s3 = inlined_call_operand.vmem [shape: f32[1,256], index: 3, kind: input, shape index: {}]
  %s4 = inlined_call_operand.hbm [shape: f32[2,256,128], index: 4, kind: input, shape index: {}]
  %s5 = inlined_call_operand.vmem [shape: f32[2,1,128], index: 5, kind: input, shape index: {}]
  %s6 = inlined_call_operand.vmem [shape: f32[8,128], index: 6, kind: output, shape index: {}]
  %s7 = sld [smem:[#allocation0]]
  $region34: #{policy_forward.1} parent=0
    _
  %s9 = ssub.s32 1, %s7
  %s10 = scalar_select 0, %s9, %s7
  %11 = sst [smem:[#allocation3]] %s0
  $region1: #{policy_forward.1} parent=0
    #allocation4 [shape = 'u8[131072]{0}', space=vmem, size = 0x20000, scoped, tag = 'input window, operand 4, single buffered']
    #allocation5 [shape = 's32[1]{0}', space=sflag, size = 0x4, scoped, tag = 'scoped memory for policy_forward.1']
    %12 = vsyncpa [#allocation5], 0
    // Predicated region
    $region2: #{policy_forward.1} parent=1 // pred_check
      _
    $region3: #{policy_forward.1} parent=1 // pred_check_branch
      %14 = sbr.rel (0) target = $region5
    $region4: #{policy_forward.1} parent=1 // pred_region
      _
    $region5: #{policy_forward.1} parent=1 // pred_fallthru
      _
    // Predicated region
    $region6: #{policy_forward.1} parent=1 // pred_check
      _
    $region7: #{policy_forward.1} parent=1 // pred_check_branch
      %16 = sbr.rel (0) target = $region9
    $region8: #{policy_forward.1} parent=1 // pred_region
      _
    $region9: #{policy_forward.1} parent=1 // pred_fallthru
      _
    // Predicated region
    $region10: #{policy_forward.1} parent=1 // pred_check
      _
    $region11: #{policy_forward.1} parent=1 // pred_check_branch
      %18 = sbr.rel (0) target = $region13
    $region12: #{policy_forward.1} parent=1 // pred_region
      _
    $region13: #{policy_forward.1} parent=1 // pred_fallthru
      _
    // Predicated region
    $region14: #{policy_forward.1} parent=1 // pred_check
      _
    $region15: #{policy_forward.1} parent=1 // pred_check_branch
      %20 = sbr.rel (0) target = $region17
    $region16: #{policy_forward.1} parent=1 // pred_region
      %s21 = sld [smem:[#allocation3]]
      %s23 = ssub.s32 4096, 4096
      %24 = vsyncadd [#allocation5], %s23
      %s25 = smul.addr %s21, 32
      %s26 = smul.addr %s25, 128
      %s27 = scalar_lea.hbm %s4, %s26
      %s28 = sshll.u32 [#allocation4], 4
      %s29 = int_to_ptr.vmem [resolvable:$true] %s28
      %34 = dma.hbm_to_vmem [thread:$0]  %s27, 4096, %s29, [#allocation5], 128, 128, 8
    $region17: #{policy_forward.1} parent=1 // pred_fallthru
      _
    // Predicated region
    $region18: #{policy_forward.1} parent=1 // pred_check
      _
    $region19: #{policy_forward.1} parent=1 // pred_check_branch
      %36 = sbr.rel (0) target = $region21
    $region20: #{policy_forward.1} parent=1 // pred_region
      %s37 = sld [smem:[#allocation3]]
      %p38 = scmp.lt.s32.totalorder %s37, 1
      %s39 = scalar_select %p38, %s37, 1
      %s40 = scalar_lea.vmem %s5, %s39
      %s41 = sld [smem:[#allocation3]]
    $region21: #{policy_forward.1} parent=1 // pred_fallthru
      _
    // Predicated region
    $region22: #{policy_forward.1} parent=1 // pred_check
      _
    $region23: #{policy_forward.1} parent=1 // pred_check_branch
      %43 = sbr.rel (0) target = $region25
    $region24: #{policy_forward.1} parent=1 // pred_region
      %44 = dma.done [#allocation5], 4096
    $region25: #{policy_forward.1} parent=1 // pred_fallthru
      _
    %s45 = sld [smem:[#allocation3]]
    %p46 = scmp.lt.s32.totalorder %s45, 1
    %s47 = scalar_select %p46, %s45, 1
    %s48 = scalar_lea.vmem %s5, %s47
    %s49 = sld [smem:[#allocation3]]
    %s50 = sld [smem:[#allocation3]]
    %p51 = scmp.lt.s32.totalorder %s50, 1
    %s52 = scalar_select %p51, %s50, 1
    %s53 = scalar_lea.vmem %s5, %s52
    %s54 = sld [smem:[#allocation3]]
    %v55 = vld [vmem:[%s1] sm:$0xff]
    %v56 = vld [vmem:[%s2] sm:$0xff]
    %v57 = vld [vmem:[%s3] sm:$0x3]
    %v59 = vlaneseq
    %v60 = vshrl.u32 %v59, 7
    %v61 = vsub.s32 0, %v60
    %v62 = vrot.slane %v57, %v61
    %v63 = vlaneseq
    %v64 = vshrl.u32 %v63, 7
    %v65 = vsub.s32 1, %v64
    %v66 = vrot.slane %v57, %v65
    %v70 = vcombine.high %v56, %v56
    %vm71 = vcmask 31744
    %v73 = vsel %vm71, %v55, 0
    %vm75 = vcmask 1043456
    %v76 = vsel %vm75, %v56, 0
    %v78 = vsel %vm75, %v70, 0
    %80 = vmatprep.subr.mxu0 0.0
    %81 = vmatpush1.msra.mxu0 0.0
    %82 = vmatprep.subr.mxu0 0.0
    %83 = vmatpush1.msra.mxu0 0.0
    %84 = vmatprep.subr.mxu0 0.0
    %85 = vmatpush1.msra.mxu0 0.0
    %86 = vmatprep.subr.mxu0 0.0
    %87 = vmatpush1.msra.mxu0 0.0
    %88 = vmatprep.subr.mxu0 0.0
    %89 = vmatpush1.msra.mxu0 0.0
    %90 = vmatprep.subr.mxu0 0.0
    %91 = vmatpush1.msra.mxu0 0.0
    %92 = vmatprep.subr.mxu0 0.0
    %93 = vmatpush1.msra.mxu0 0.0
    %94 = vmatprep.subr.mxu0 0.0
    %95 = vmatpush1.msra.mxu0 0.0
    %96 = vmatprep.subr.mxu0 0.0
    %97 = vmatpush1.msra.mxu0 0.0
    %98 = vmatprep.subr.mxu0 0.0
    %99 = vmatpush1.msra.mxu0 0.0
    %100 = vmatprep.subr.mxu0 0.0
    %101 = vmatpush1.msra.mxu0 0.0
    %102 = vmatprep.subr.mxu0 0.0
    %103 = vmatpush1.msra.mxu0 0.0
    %104 = vmatprep.subr.mxu0 0.0
    %105 = vmatpush1.msra.mxu0 0.0
    %106 = vmatprep.subr.mxu0 0.0
    %107 = vmatpush1.msra.mxu0 0.0
    %108 = vmatprep.subr.mxu0 0.0
    %109 = vmatpush1.msra.mxu0 0.0
    %110 = vmatprep.subr.mxu0 %v78
    %111 = vmatpush1.msra.mxu0 %v76
    %112 = vmatprep.subr.mxu0 0.0
    %113 = vmatpush2.msra.mxu0 0.0
    %114 = vmatprep.subr.mxu0 0.0
    %115 = vmatpush2.msra.mxu0 0.0
    %116 = vmatprep.subr.mxu0 0.0
    %117 = vmatpush2.msra.mxu0 0.0
    %118 = vmatprep.subr.mxu0 0.0
    %119 = vmatpush2.msra.mxu0 0.0
    %120 = vmatprep.subr.mxu0 0.0
    %121 = vmatpush2.msra.mxu0 0.0
    %122 = vmatprep.subr.mxu0 0.0
    %123 = vmatpush2.msra.mxu0 0.0
    %124 = vmatprep.subr.mxu0 0.0
    %125 = vmatpush2.msra.mxu0 0.0
    %126 = vmatprep.subr.mxu0 0.0
    %127 = vmatpush2.msra.mxu0 0.0
    %128 = vmatprep.subr.mxu0 0.0
    %129 = vmatpush2.msra.mxu0 0.0
    %130 = vmatprep.subr.mxu0 0.0
    %131 = vmatpush2.msra.mxu0 0.0
    %132 = vmatprep.subr.mxu0 0.0
    %133 = vmatpush2.msra.mxu0 0.0
    %134 = vmatprep.subr.mxu0 0.0
    %135 = vmatpush2.msra.mxu0 0.0
    %136 = vmatprep.subr.mxu0 0.0
    %137 = vmatpush2.msra.mxu0 0.0
    %138 = vmatprep.subr.mxu0 0.0
    %139 = vmatpush2.msra.mxu0 0.0
    %140 = vmatprep.subr.mxu0 0.0
    %141 = vmatpush2.msra.mxu0 0.0
    %142 = vmatprep.subr.mxu0 0.0
    %143 = vmatpush2.msra.mxu0 0.0
    %144 = vmatprep.mubr.f32.mxu0 0.0
    %145 = vmatmul.mubr.f32.gmra.mxu0 %v73
    %v146 = vpop.f32.mrf.mxu0
    %v147 = vadd.f32 %v62, %v146
    %v148 = vpop.f32.mrf.mxu0
    %v149 = vadd.f32 %v66, %v148
    %150 = vdwg.mxu0
    %v151 = vmax.f32 %v147, 0.0
    %v152 = vmax.f32 %v149, 0.0
    %v153 = vld [vmem:[#allocation4] sm:$0xff]
    %v154 = vld [vmem:[#allocation4 + $0x8] sm:$0xff]
    %v155 = vld [vmem:[#allocation4 + $0x10] sm:$0xff]
    %v156 = vld [vmem:[#allocation4 + $0x18] sm:$0xff]
    %v157 = vld [vmem:[#allocation4 + $0x20] sm:$0xff]
    %v158 = vld [vmem:[#allocation4 + $0x28] sm:$0xff]
    %v159 = vld [vmem:[#allocation4 + $0x30] sm:$0xff]
    %v160 = vld [vmem:[#allocation4 + $0x38] sm:$0xff]
    %v161 = vld [vmem:[#allocation4 + $0x40] sm:$0xff]
    %v162 = vld [vmem:[#allocation4 + $0x48] sm:$0xff]
    %v163 = vld [vmem:[#allocation4 + $0x50] sm:$0xff]
    %v164 = vld [vmem:[#allocation4 + $0x58] sm:$0xff]
    %v165 = vld [vmem:[#allocation4 + $0x60] sm:$0xff]
    %v166 = vld [vmem:[#allocation4 + $0x68] sm:$0xff]
    %v167 = vld [vmem:[#allocation4 + $0x70] sm:$0xff]
    %v168 = vld [vmem:[#allocation4 + $0x78] sm:$0xff]
    %v169 = vld [vmem:[#allocation4 + $0x80] sm:$0xff]
    %v170 = vld [vmem:[#allocation4 + $0x88] sm:$0xff]
    %v171 = vld [vmem:[#allocation4 + $0x90] sm:$0xff]
    %v172 = vld [vmem:[#allocation4 + $0x98] sm:$0xff]
    %v173 = vld [vmem:[#allocation4 + $0xa0] sm:$0xff]
    %v174 = vld [vmem:[#allocation4 + $0xa8] sm:$0xff]
    %v175 = vld [vmem:[#allocation4 + $0xb0] sm:$0xff]
    %v176 = vld [vmem:[#allocation4 + $0xb8] sm:$0xff]
    %v177 = vld [vmem:[#allocation4 + $0xc0] sm:$0xff]
    %v178 = vld [vmem:[#allocation4 + $0xc8] sm:$0xff]
    %v179 = vld [vmem:[#allocation4 + $0xd0] sm:$0xff]
    %v180 = vld [vmem:[#allocation4 + $0xd8] sm:$0xff]
    %v181 = vld [vmem:[#allocation4 + $0xe0] sm:$0xff]
    %v182 = vld [vmem:[#allocation4 + $0xe8] sm:$0xff]
    %v183 = vld [vmem:[#allocation4 + $0xf0] sm:$0xff]
    %v184 = vld [vmem:[#allocation4 + $0xf8] sm:$0xff]
    %v185 = vld [vmem:[%s53] sm:$0x1]
    %v187 = vlaneseq
    %v188 = vshrl.u32 %v187, 7
    %v189 = vsub.s32 0, %v188
    %v190 = vrot.slane %v185, %v189
    %192 = vmatprep.subr.mxu0 0.0
    %193 = vmatpush1.msra.mxu0 %v168
    %194 = vmatprep.subr.mxu0 0.0
    %195 = vmatpush1.msra.mxu0 %v167
    %196 = vmatprep.subr.mxu0 0.0
    %197 = vmatpush1.msra.mxu0 %v166
    %198 = vmatprep.subr.mxu0 0.0
    %199 = vmatpush1.msra.mxu0 %v165
    %200 = vmatprep.subr.mxu0 0.0
    %201 = vmatpush1.msra.mxu0 %v164
    %202 = vmatprep.subr.mxu0 0.0
    %203 = vmatpush1.msra.mxu0 %v163
    %204 = vmatprep.subr.mxu0 0.0
    %205 = vmatpush1.msra.mxu0 %v162
    %206 = vmatprep.subr.mxu0 0.0
    %207 = vmatpush1.msra.mxu0 %v161
    %208 = vmatprep.subr.mxu0 0.0
    %209 = vmatpush1.msra.mxu0 %v160
    %210 = vmatprep.subr.mxu0 0.0
    %211 = vmatpush1.msra.mxu0 %v159
    %212 = vmatprep.subr.mxu0 0.0
    %213 = vmatpush1.msra.mxu0 %v158
    %214 = vmatprep.subr.mxu0 0.0
    %215 = vmatpush1.msra.mxu0 %v157
    %216 = vmatprep.subr.mxu0 0.0
    %217 = vmatpush1.msra.mxu0 %v156
    %218 = vmatprep.subr.mxu0 0.0
    %219 = vmatpush1.msra.mxu0 %v155
    %220 = vmatprep.subr.mxu0 0.0
    %221 = vmatpush1.msra.mxu0 %v154
    %222 = vmatprep.subr.mxu0 0.0
    %223 = vmatpush1.msra.mxu0 %v153
    %224 = vmatprep.subr.mxu0 0.0
    %225 = vmatpush2.msra.mxu0 %v184
    %226 = vmatprep.subr.mxu0 0.0
    %227 = vmatpush2.msra.mxu0 %v183
    %228 = vmatprep.subr.mxu0 0.0
    %229 = vmatpush2.msra.mxu0 %v182
    %230 = vmatprep.subr.mxu0 0.0
    %231 = vmatpush2.msra.mxu0 %v181
    %232 = vmatprep.subr.mxu0 0.0
    %233 = vmatpush2.msra.mxu0 %v180
    %234 = vmatprep.subr.mxu0 0.0
    %235 = vmatpush2.msra.mxu0 %v179
    %236 = vmatprep.subr.mxu0 0.0
    %237 = vmatpush2.msra.mxu0 %v178
    %238 = vmatprep.subr.mxu0 0.0
    %239 = vmatpush2.msra.mxu0 %v177
    %240 = vmatprep.subr.mxu0 0.0
    %241 = vmatpush2.msra.mxu0 %v176
    %242 = vmatprep.subr.mxu0 0.0
    %243 = vmatpush2.msra.mxu0 %v175
    %244 = vmatprep.subr.mxu0 0.0
    %245 = vmatpush2.msra.mxu0 %v174
    %246 = vmatprep.subr.mxu0 0.0
    %247 = vmatpush2.msra.mxu0 %v173
    %248 = vmatprep.subr.mxu0 0.0
    %249 = vmatpush2.msra.mxu0 %v172
    %250 = vmatprep.subr.mxu0 0.0
    %251 = vmatpush2.msra.mxu0 %v171
    %252 = vmatprep.subr.mxu0 0.0
    %253 = vmatpush2.msra.mxu0 %v170
    %254 = vmatprep.subr.mxu0 0.0
    %255 = vmatpush2.msra.mxu0 %v169
    %256 = vmatprep.mubr.f32.mxu0 %v152
    %257 = vmatmul.mubr.f32.gmra.mxu0 %v151
    %v258 = vpop.f32.mrf.mxu0
    %v259 = vadd.f32 %v190, %v258
    %v260 = vpop.f32.mrf.mxu0
    %261 = vdwg.mxu0
    %v262 = vlaneseq
    %v263 = vand.u32 %v262, 127
    %vm264 = vcmp.eq.s32.totalorder %v263, 1
    %vm265 = vcmp.eq.s32.totalorder %v263, 4
    %vm266 = vmor %vm264, %vm265
    %v267 = vmax.f32 %v259, 0.0
    %vm268 = vcmp.ne.f32.partialorder %v259, %v259
    %v269 = vadd.f32 %v259, 0.0
    %v270 = vand.u32 2147483647, %v259
    %v271 = vsub.f32 0.0, %v270
    %v272 = vmul.f32 %v271, 1.442695
    %v273 = vpow.pop %v272
    %v274 = vadd.f32 %v273, 1.0
    %v275 = vlog2.pop %v274
    %v276 = vmul.f32 %v275, 0.6931472
    %v277 = vmul.f32 -0.5, %v273
    %v278 = vadd.f32 %v277, 1.0
    %v279 = vmul.f32 %v278, %v273
    %v280 = vand.u32 2147483647, %v273
    %vm281 = vcmp.lt.f32.partialorder %v280, 0.0004427343
    %v282 = vsel %vm281, %v279, %v276
    %v283 = vadd.f32 %v267, %v282
    %v284 = vsel %vm268, %v269, %v283
    %v285 = vsel %vm266, %v284, %v259
    %286 = vst [vmem:[%s6] sm:$0xff] %v285
    // Predicated region
    $region26: #{policy_forward.1} parent=1 // pred_check
      _
    $region27: #{policy_forward.1} parent=1 // pred_check_branch
      %288 = sbr.rel (0) target = $region29
    $region28: #{policy_forward.1} parent=1 // pred_region
      _
    $region29: #{policy_forward.1} parent=1 // pred_fallthru
      _
    // Predicated region
    $region30: #{policy_forward.1} parent=1 // pred_check
      _
    $region31: #{policy_forward.1} parent=1 // pred_check_branch
      %290 = sbr.rel (0) target = $region33
    $region32: #{policy_forward.1} parent=1 // pred_region
      _
    $region33: #{policy_forward.1} parent=1 // pred_fallthru
      _
    %291 = vsyncpa [#allocation5], 1

</llo_original>
